<compile_context>
chip_gen: v5e
topology: v5e:2x2
jax: 0.10.0
libtpu: 0.0.40
codegen_flags: <defaults>
</compile_context>

<pallas_src>
import functools
from typing import List

import numpy as np
import jax
import jax.numpy as jnp
from jax import lax
from jax.experimental import pallas as pl
from jax.experimental.pallas import tpu as pltpu


def _round_up(x: int, m: int) -> int:
    return (x + m - 1) // m * m


# --------------------------------------------------------------------------
# Kernels
# --------------------------------------------------------------------------
def _token_routing_kernel(x_ref, w_ref, mshift_ref, pbig_ref, mp_ref, o_ref,
                          *, num_clusters: int):
    """Token-level level-1 routing; one (1, tile_S, H) block per grid step."""
    x = x_ref[0]                                            # [T, H]   bf16
    w = w_ref[...]                                          # [H, Gp]  bf16
    y = jnp.dot(x, w, preferred_element_type=jnp.float32)   # [T, Gp]  f32

    T, G_pad = y.shape
    lane = lax.broadcasted_iota(jnp.int32, (T, G_pad), 1)
    is_cluster = lane < num_clusters

    # argmax over cluster lanes, first-occurrence tie-break (== torch.argmax;
    # softmax is monotone so argmax of logits == argmax of softmax).
    cl = jnp.where(is_cluster, y, -jnp.inf)
    mx = jnp.max(cl, axis=-1, keepdims=True)
    ismax = jnp.logical_and(cl == mx, is_cluster)
    first = jnp.min(jnp.where(ismax, lane, G_pad), axis=-1, keepdims=True)
    onehot = (lane == first).astype(jnp.float32)            # [T, Gp]

    # slot mask in the fused-lane space, then gather slots -> expert columns
    slot_mask = jnp.dot(onehot, mshift_ref[...],
                        preferred_element_type=jnp.float32)  # [T, Gp]
    masked = y * slot_mask
    out_vals = jnp.dot(masked, pbig_ref[...],
                       preferred_element_type=jnp.float32)   # [T, Ep]
    sel = jnp.dot(onehot, mp_ref[...],
                  preferred_element_type=jnp.float32)        # [T, Ep]

    min_val = jnp.finfo(o_ref.dtype).min
    o_ref[0] = jnp.where(sel > 0.5, out_vals, min_val).astype(o_ref.dtype)


def _sentence_routing_kernel(x_ref, w_ref, slot_ref, sel_ref, pbig_ref, o_ref):
    """Sentence-level level-1 routing precomputed outside; masks are per-batch rows."""
    x = x_ref[0]                                            # [T, H]   bf16
    w = w_ref[...]                                          # [H, Gp]  bf16
    y = jnp.dot(x, w, preferred_element_type=jnp.float32)   # [T, Gp]  f32

    slot_row = slot_ref[0]                                  # [1, Gp]  f32
    sel_row = sel_ref[0]                                    # [1, Ep]  f32

    masked = y * slot_row                                   # broadcast over T
    out_vals = jnp.dot(masked, pbig_ref[...],
                       preferred_element_type=jnp.float32)  # [T, Ep]

    min_val = jnp.finfo(o_ref.dtype).min
    o_ref[0] = jnp.where(sel_row > 0.5, out_vals, min_val).astype(o_ref.dtype)


# --------------------------------------------------------------------------
# Wrapper
# --------------------------------------------------------------------------
def hierarchical_gate_pallas(x, wc, expert_weights: List[jnp.ndarray],
                             cluster_expert_id_list: List[List[int]],
                             cluster_token_routing: bool,
                             *, max_tile_s: int = 512):
    """x: [B, S, H].  wc: [C, H] (nn.Linear weight).  expert_weights[c]: [n_c, H]."""
    B, S, H = x.shape
    C = len(cluster_expert_id_list)
    E = len({e for lst in cluster_expert_id_list for e in lst})
    N_sum = sum(len(lst) for lst in cluster_expert_id_list)
    G = C + N_sum
    G_pad = _round_up(G, 128)
    E_pad = _round_up(E, 128)
    out_dtype = x.dtype

    # token-tile size (second-to-last block dim must be a multiple of 8)
    tile = min(_round_up(S, 8), max_tile_s)
    S_pad = _round_up(S, tile)

    # ---- fused, lane-padded, bf16 gate weight: [H, G_pad] ----
    we_t = jnp.concatenate([w.T for w in expert_weights], axis=1)   # [H, N_sum]
    W = jnp.concatenate([wc.T, we_t], axis=1)                       # [H, G]
    W = jnp.pad(W, ((0, 0), (0, G_pad - G))).astype(jnp.bfloat16)

    # ---- constant 0/1 mapping matrices in the padded lane space ----
    M_shift_np = np.zeros((G_pad, G_pad), np.float32)   # cluster c -> its slot lanes
    P_big_np = np.zeros((G_pad, E_pad), np.float32)     # slot lane  -> expert column
    MP_big_np = np.zeros((G_pad, E_pad), np.float32)    # cluster c -> its expert columns
    k = 0
    for c, lst in enumerate(cluster_expert_id_list):
        for e in lst:
            M_shift_np[c, C + k] = 1.0
            P_big_np[C + k, e] = 1.0
            MP_big_np[c, e] = 1.0
            k += 1
    M_shift = jnp.asarray(M_shift_np)
    P_big = jnp.asarray(P_big_np)
    MP_big = jnp.asarray(MP_big_np)

    # bf16 input, padded along S so the tile divides it
    x_b = x.astype(jnp.bfloat16)
    if S_pad != S:
        x_b = jnp.pad(x_b, ((0, 0), (0, S_pad - S), (0, 0)))

    grid = (B, S_pad // tile)

    # explicit VMEM budget (double-buffered x/out/W + constants, with headroom)
    itemsize_out = jnp.dtype(out_dtype).itemsize
    per_buf = (tile * H * 2 + tile * E_pad * itemsize_out + H * G_pad * 2
               + 3 * G_pad * max(G_pad, E_pad) * 4)
    vmem_limit = int(min(100 * 1024 * 1024, max(32 * 1024 * 1024, 3 * per_buf)))

    compiler_params = pltpu.CompilerParams(
        dimension_semantics=("parallel", "parallel"),
        vmem_limit_bytes=vmem_limit)
    # TODO(synk): single-buffer the grid-invariant operands (W, M_shift, P_big,
    # MP_big) via pipeline_mode once pl.Buffered(1) is guaranteed on all gens.

    if cluster_token_routing:
        kernel = functools.partial(_token_routing_kernel, num_clusters=C)
        out = pl.pallas_call(
            kernel,
            out_shape=jax.ShapeDtypeStruct((B, S_pad, E_pad), out_dtype),
            grid=grid,
            in_specs=[
                pl.BlockSpec((1, tile, H), lambda b, s: (b, s, 0)),
                pl.BlockSpec((H, G_pad), lambda b, s: (0, 0)),
                pl.BlockSpec((G_pad, G_pad), lambda b, s: (0, 0)),
                pl.BlockSpec((G_pad, E_pad), lambda b, s: (0, 0)),
                pl.BlockSpec((G_pad, E_pad), lambda b, s: (0, 0)),
            ],
            out_specs=pl.BlockSpec((1, tile, E_pad), lambda b, s: (b, s, 0)),
            compiler_params=compiler_params,
        )(x_b, W, M_shift, P_big, MP_big)
    else:
        # Level-1 sentence routing in plain XLA, f32, over the FULL sequence
        # (exactly the module's semantics; decoupled from the S tiling).
        sent = x.mean(axis=1)                                # [B, H]
        cl_logits = sent @ wc.T                              # [B, C]
        idx = jnp.argmax(cl_logits, axis=-1)                 # softmax is monotone
        onehot_b = jax.nn.one_hot(idx, C, dtype=jnp.float32)  # [B, C]
        slot_rows = (onehot_b @ M_shift[:C, :]).reshape(B, 1, G_pad)
        sel_rows = (onehot_b @ MP_big[:C, :]).reshape(B, 1, E_pad)

        out = pl.pallas_call(
            _sentence_routing_kernel,
            out_shape=jax.ShapeDtypeStruct((B, S_pad, E_pad), out_dtype),
            grid=grid,
            in_specs=[
                pl.BlockSpec((1, tile, H), lambda b, s: (b, s, 0)),
                pl.BlockSpec((H, G_pad), lambda b, s: (0, 0)),
                pl.BlockSpec((1, 1, G_pad), lambda b, s: (b, 0, 0)),
                pl.BlockSpec((1, 1, E_pad), lambda b, s: (b, 0, 0)),
                pl.BlockSpec((G_pad, E_pad), lambda b, s: (0, 0)),
            ],
            out_specs=pl.BlockSpec((1, tile, E_pad), lambda b, s: (b, s, 0)),
            compiler_params=compiler_params,
        )(x_b, W, slot_rows, sel_rows, P_big)

    return out[:, :S, :E]


# --------------------------------------------------------------------------
# Pure-JAX reference (module semantics; gate matmuls on bf16-quantized inputs
# to match the kernel's bf16 MXU path, accumulation in f32).
# --------------------------------------------------------------------------
def hierarchical_gate_reference(x, wc, expert_weights, cluster_expert_id_list,
                                cluster_token_routing):
    B, S, H = x.shape
    E = len({e for lst in cluster_expert_id_list for e in lst})
    xq = x.astype(jnp.bfloat16).astype(jnp.float32)
    wcq = wc.astype(jnp.bfloat16).astype(jnp.float32)
    ewq = [w.astype(jnp.bfloat16).astype(jnp.float32) for w in expert_weights]
    xf = xq.reshape(-1, H)

    if cluster_token_routing:
        cl_logits = xf @ wcq.T                               # [B*S, C]
        idx = jnp.argmax(cl_logits, axis=-1)
    else:
        sent = x.mean(axis=1)                                # f32 (matches wrapper)
        cl_logits = sent @ wc.T
        idx = jnp.repeat(jnp.argmax(cl_logits, axis=-1), S)

    out = jnp.full((B * S, E), jnp.finfo(x.dtype).min, x.dtype)
    for c, (w, ids) in enumerate(zip(ewq, cluster_expert_id_list)):
        local = xf @ w.T                                     # [B*S, n_c]
        mask = idx == c
        for j, e in enumerate(ids):
            out = out.at[:, e].set(jnp.where(mask, local[:, j], out[:, e]))
    return out.reshape(B, S, E)


if __name__ == "__main__":
    # Small shapes consistent with the module's example.
    B, S, H = 2, 8, 32
    cluster_expert_id_list = [[0, 1], [2, 3], [3, 4]]

    key = jax.random.PRNGKey(0)
    kx, kc, *ke = jax.random.split(key, 3 + len(cluster_expert_id_list))

    x = jax.random.normal(kx, (B, S, H), dtype=jnp.float32)
    C = len(cluster_expert_id_list)
    wc = jax.random.normal(kc, (C, H), dtype=jnp.float32) * (1.0 / np.sqrt(H))
    expert_weights = [
        jax.random.normal(k, (len(lst), H), dtype=jnp.float32) * (1.0 / np.sqrt(H))
        for k, lst in zip(ke, cluster_expert_id_list)
    ]

    # sentence-level level-1 routing (as in the module docstring example)
    out_sent = jax.block_until_ready(
        hierarchical_gate_pallas(x, wc, expert_weights,
                                 cluster_expert_id_list, False))
    ref_sent = hierarchical_gate_reference(x, wc, expert_weights,
                                           cluster_expert_id_list, False)
    np.testing.assert_allclose(np.asarray(out_sent), np.asarray(ref_sent),
                               rtol=5e-3, atol=5e-3)

    # token-level level-1 routing
    out_tok = jax.block_until_ready(
        hierarchical_gate_pallas(x, wc, expert_weights,
                                 cluster_expert_id_list, True))
    ref_tok = hierarchical_gate_reference(x, wc, expert_weights,
                                          cluster_expert_id_list, True)
    np.testing.assert_allclose(np.asarray(out_tok), np.asarray(ref_tok),
                               rtol=5e-3, atol=5e-3)

    print("KERNEL_OK")
</pallas_src>

<mosaic_0001>
module attributes {stable_mosaic.version = 11 : i64} {
  func.func @_sentence_routing_kernel(%arg0: i32, %arg1: i32, %arg2: memref<1x8x32xbf16, #tpu.memory_space<vmem>>, %arg3: memref<32x128xbf16, #tpu.memory_space<vmem>>, %arg4: memref<1x1x128xf32, #tpu.memory_space<vmem>>, %arg5: memref<1x1x128xf32, #tpu.memory_space<vmem>>, %arg6: memref<128x128xf32, #tpu.memory_space<vmem>>, %arg7: memref<1x8x128xf32, #tpu.memory_space<vmem>>) attributes {dimension_semantics = [#tpu.dimension_semantics<parallel>, #tpu.dimension_semantics<parallel>], iteration_bounds = array<i64: 2, 1>, scalar_prefetch = 0 : i64, scratch_operands = 0 : i64, tpu.core_type = #tpu.core_type<tc>, window_params = [{transform_indices = @transform_0, window_bounds = array<i64: 1, 8, 32>}, {pipeline_mode = #tpu.pipeline_mode<synchronous>, transform_indices = @transform_1, window_bounds = array<i64: 32, 128>}, {transform_indices = @transform_2, window_bounds = array<i64: 1, 1, 128>}, {transform_indices = @transform_3, window_bounds = array<i64: 1, 1, 128>}, {pipeline_mode = #tpu.pipeline_mode<synchronous>, transform_indices = @transform_4, window_bounds = array<i64: 128, 128>}, {transform_indices = @transform_5, window_bounds = array<i64: 1, 8, 128>}]} {
    %c0 = arith.constant 0 : index
    %c0_0 = arith.constant 0 : index
    %c0_1 = arith.constant 0 : index
    %0 = vector.load %arg2[%c0, %c0_0, %c0_1] : memref<1x8x32xbf16, #tpu.memory_space<vmem>>, vector<1x8x32xbf16>
    %1 = vector.shape_cast %0 : vector<1x8x32xbf16> to vector<8x32xbf16>
    %c0_2 = arith.constant 0 : index
    %c0_3 = arith.constant 0 : index
    %2 = vector.load %arg3[%c0_2, %c0_3] : memref<32x128xbf16, #tpu.memory_space<vmem>>, vector<32x128xbf16>
    %cst = arith.constant dense<0.000000e+00> : vector<8x128xf32>
    %3 = tpu.matmul %1, %2, %cst {dimension_numbers = #tpu.dot_dimension_numbers<[1], [0], [0], [1], [0, 0, 1, 1], [], []>} : vector<8x32xbf16>, vector<32x128xbf16>, vector<8x128xf32> -> vector<8x128xf32>
    %c0_4 = arith.constant 0 : index
    %c0_5 = arith.constant 0 : index
    %c0_6 = arith.constant 0 : index
    %4 = vector.load %arg4[%c0_4, %c0_5, %c0_6] : memref<1x1x128xf32, #tpu.memory_space<vmem>>, vector<1x1x128xf32>
    %5 = vector.shape_cast %4 : vector<1x1x128xf32> to vector<1x128xf32>
    %c0_7 = arith.constant 0 : index
    %c0_8 = arith.constant 0 : index
    %c0_9 = arith.constant 0 : index
    %6 = vector.load %arg5[%c0_7, %c0_8, %c0_9] : memref<1x1x128xf32, #tpu.memory_space<vmem>>, vector<1x1x128xf32>
    %7 = vector.shape_cast %6 : vector<1x1x128xf32> to vector<1x128xf32>
    %8 = vector.broadcast %5 : vector<1x128xf32> to vector<8x128xf32>
    %9 = arith.mulf %3, %8 : vector<8x128xf32>
    %c0_10 = arith.constant 0 : index
    %c0_11 = arith.constant 0 : index
    %10 = vector.load %arg6[%c0_10, %c0_11] : memref<128x128xf32, #tpu.memory_space<vmem>>, vector<128x128xf32>
    %cst_12 = arith.constant dense<0.000000e+00> : vector<8x128xf32>
    %11 = tpu.matmul %9, %10, %cst_12 {dimension_numbers = #tpu.dot_dimension_numbers<[1], [0], [0], [1], [0, 0, 1, 1], [], []>} : vector<8x128xf32>, vector<128x128xf32>, vector<8x128xf32> -> vector<8x128xf32>
    %cst_13 = arith.constant 5.000000e-01 : f32
    %12 = vector.broadcast %cst_13 : f32 to vector<1x128xf32>
    %13 = arith.cmpf ogt, %7, %12 : vector<1x128xf32>
    %cst_14 = arith.constant -3.40282347E+38 : f32
    %14 = vector.shape_cast %13 : vector<1x128xi1> to vector<1x128xi1>
    %15 = vector.broadcast %14 : vector<1x128xi1> to vector<8x128xi1>
    %16 = vector.broadcast %cst_14 : f32 to vector<8x128xf32>
    %17 = arith.select %15, %11, %16 : vector<8x128xi1>, vector<8x128xf32>
    %c0_15 = arith.constant 0 : index
    %c0_16 = arith.constant 0 : index
    %c0_17 = arith.constant 0 : index
    %18 = vector.load %arg7[%c0_15, %c0_16, %c0_17] : memref<1x8x128xf32, #tpu.memory_space<vmem>>, vector<1x8x128xf32>
    %19 = vector.shape_cast %18 : vector<1x8x128xf32> to vector<8x128xf32>
    %20 = vector.shape_cast %17 : vector<8x128xf32> to vector<1x8x128xf32>
    tpu.vector_store %arg7[%c0_15, %c0_16, %c0_17], %20 {strides = array<i32>} : memref<1x8x128xf32, #tpu.memory_space<vmem>>, vector<1x8x128xf32>,
    return
  }
  func.func @transform_0(%arg0: i32, %arg1: i32) -> (i32, i32, i32) {
    %c0_i32 = arith.constant 0 : i32
    %c0_i32_0 = arith.constant 0 : i32
    return %arg0, %arg1, %c0_i32 : i32, i32, i32
  }
  func.func @transform_1(%arg0: i32, %arg1: i32) -> (i32, i32) {
    %c0_i32 = arith.constant 0 : i32
    %c0_i32_0 = arith.constant 0 : i32
    %c0_i32_1 = arith.constant 0 : i32
    return %c0_i32, %c0_i32_0 : i32, i32
  }
  func.func @transform_2(%arg0: i32, %arg1: i32) -> (i32, i32, i32) {
    %c0_i32 = arith.constant 0 : i32
    %c0_i32_0 = arith.constant 0 : i32
    %c0_i32_1 = arith.constant 0 : i32
    return %arg0, %c0_i32, %c0_i32_0 : i32, i32, i32
  }
  func.func @transform_3(%arg0: i32, %arg1: i32) -> (i32, i32, i32) {
    %c0_i32 = arith.constant 0 : i32
    %c0_i32_0 = arith.constant 0 : i32
    %c0_i32_1 = arith.constant 0 : i32
    return %arg0, %c0_i32, %c0_i32_0 : i32, i32, i32
  }
  func.func @transform_4(%arg0: i32, %arg1: i32) -> (i32, i32) {
    %c0_i32 = arith.constant 0 : i32
    %c0_i32_0 = arith.constant 0 : i32
    %c0_i32_1 = arith.constant 0 : i32
    return %c0_i32, %c0_i32_0 : i32, i32
  }
  func.func @transform_5(%arg0: i32, %arg1: i32) -> (i32, i32, i32) {
    %c0_i32 = arith.constant 0 : i32
    %c0_i32_0 = arith.constant 0 : i32
    return %arg0, %arg1, %c0_i32 : i32, i32, i32
  }
}

</mosaic_0001>

<llo_original>
// kernel: tpu_custom_call.1
$region0: #{tpu_custom_call.1}
  #allocation0 [shape = 'u32[]', space=smem, size = 0x4, offset = 0x4, fixed_abs, tag = 'smem constant byte address 0x4 - core index']
  #allocation1 [shape = 'u32[72,128]{1,0:T(1,128)}', space=vmem, size = 0x9000, scoped, tag = 'internal scratch']
  %s0 = inlined_call_operand.hbm [shape: bf16[2,8,32], index: 0, kind: input, shape index: {}]
  %s1 = inlined_call_operand.hbm [shape: bf16[32,128], index: 1, kind: input, shape index: {}]
  %s2 = inlined_call_operand.hbm [shape: f32[2,1,128], index: 2, kind: input, shape index: {}]
  %s3 = inlined_call_operand.vmem [shape: f32[2,1,128], index: 3, kind: input, shape index: {}]
  %s4 = inlined_call_operand.hbm [shape: f32[128,128], index: 4, kind: input, shape index: {}]
  %s5 = inlined_call_operand.hbm [shape: f32[2,8,128], index: 5, kind: output, shape index: {}]
  %s6 = sld [smem:[#allocation0]]
  $region69: #{tpu_custom_call.1} parent=0
    _
  %s8 = ssub.s32 1, %s6
  %s9 = scalar_select 0, %s8, %s6
  $region1: #{tpu_custom_call.1} parent=0
    #allocation2 [shape = 'u8[4096]{0}', space=vmem, size = 0x1000, scoped, tag = 'input window, operand 0']
    #allocation3 [shape = 's32[2]{0}', space=sflag, size = 0x8, scoped, tag = 'scoped memory for tpu_custom_call.1']
    #allocation4 [shape = 's32[2]{0}', space=sflag, size = 0x8, scoped, tag = 'scoped memory for tpu_custom_call.1']
    #allocation5 [shape = 'u8[8192]{0}', space=vmem, size = 0x2000, scoped, tag = 'input window, operand 1, single buffered']
    #allocation6 [shape = 's32[1]{0}', space=sflag, size = 0x4, scoped, tag = 'scoped memory for tpu_custom_call.1']
    #allocation7 [shape = 'u8[1024]{0}', space=vmem, size = 0x400, scoped, tag = 'input window, operand 2']
    #allocation8 [shape = 'u8[65536]{0}', space=vmem, size = 0x10000, scoped, tag = 'input window, operand 4, single buffered']
    #allocation9 [shape = 'u8[8192]{0}', space=vmem, size = 0x2000, scoped, tag = 'output window, operand 0']
    %10 = vsyncpa [#allocation3], 0
    %s11 = scalar_lea.sflag [#allocation3], 1
    %12 = vsyncpa %s11, 0
    %13 = vsyncpa [#allocation6], 0
    %14 = vsyncpa [#allocation4], 0
    %s15 = scalar_lea.sflag [#allocation4], 1
    %16 = vsyncpa %s15, 0
    loop: start=0, step=1, limit=4
    $region2: #{tpu_custom_call.1} parent=1 // loop_pre_header
      _
    $region3: #{tpu_custom_call.1} parent=1 // loop_header
      %s18 = sphi 0, %s22
      %p19 = scmp.ge.s32.totalorder %s18, 4
      %s25 = sphi 0, %s37
      %s26 = sphi 0, %s33
      %s27 = sphi 0, %s25
      %s28 = sphi 0, %s26
      %s29 = sphi 0, %s27
      %s30 = sphi 0, %s28
      %s42 = sphi 0, %s44
      %s45 = sphi 0, %s42
      %s46 = sphi 0, %s45
      %s62 = sphi 0, %s46
      %s66 = sphi 0, %s66
      %s68 = sphi 0, %s66
      %s69 = sphi 0, %s68
      %s83 = sphi 0, %s69
      %s89 = sphi 0, %s91
      %s92 = sphi 0, %s89
      %s93 = sphi 0, %s92
      %s109 = sphi 0, %s93
      %s115 = sphi 0, %s117
      %s118 = sphi 0, %s115
      %s119 = sphi 0, %s118
      %s135 = sphi 0, %s119
      %s139 = sphi 0, %s139
      %s141 = sphi 0, %s139
      %s142 = sphi 0, %s141
      %s156 = sphi 0, %s142
      %s164 = sphi 0, %s166
      %s167 = sphi 0, %s164
      %s168 = sphi 0, %s167
      %s184 = sphi 0, %s168
    $region4: #{tpu_custom_call.1} parent=1 // loop_header_branch
      %21 = sbr.rel (%p19) target = $region8
    $region5: #{tpu_custom_call.1} parent=1 // loop_body
      %s23 = ssub.s32 %s18, 1
      %s24 = ssub.s32 %s18, 2
      %s31 = sadd.s32 1, %s26
      %p32 = scmp.ge.s32.totalorder %s31, 1
      %s33 = scalar_select %p32, 0, %s31
      %s34 = sadd.s32 1, %s25
      %s35 = scalar_select %p32, %s34, %s25
      %p36 = scmp.ge.s32.totalorder %s35, 2
      %s37 = scalar_select %p36, 0, %s35
      %s38 = ssub.s32 %s25, %s37
      %s39 = ssub.s32 %s26, %s33
      %s40 = sor.u32 %s38, %s39
      %p41 = scmp.eq.s32.totalorder %s40, 0
      %s43 = sadd.s32 %s42, 1
      %s44 = scalar_select %p41, %s42, %s43
      %p47 = pneg %p41
      %p48 = scmp.eq.s32.totalorder %s18, 1
      %p49 = por %p47, %p48
      %p50 = scmp.ne.s32.totalorder %s42, %s45
      %p51 = scmp.eq.s32.totalorder %s18, 0
      %p52 = por %p50, %p51
      %p53 = scmp.ne.s32.totalorder %s42, %s45
      %p54 = scmp.eq.s32.totalorder %s23, 1
      %p55 = por %p53, %p54
      %p56 = scmp.ne.s32.totalorder %s45, %s46
      %p57 = scmp.eq.s32.totalorder %s23, 0
      %p58 = por %p56, %p57
      %p59 = scmp.ne.s32.totalorder %s45, %s46
      %p60 = scmp.eq.s32.totalorder %s24, 1
      %p61 = por %p59, %p60
      %p63 = scmp.ne.s32.totalorder %s46, %s62
      %p64 = scmp.eq.s32.totalorder %s24, 0
      %p65 = por %p63, %p64
      %s67 = sadd.s32 %s66, 1
      %p70 = scmp.eq.s32.totalorder %s18, 1
      %p71 = scmp.ne.s32.totalorder %s66, %s68
      %p72 = scmp.eq.s32.totalorder %s18, 0
      %p73 = por %p71, %p72
      %p74 = scmp.ne.s32.totalorder %s66, %s68
      %p75 = scmp.eq.s32.totalorder %s23, 1
      %p76 = por %p74, %p75
      %p77 = scmp.ne.s32.totalorder %s68, %s69
      %p78 = scmp.eq.s32.totalorder %s23, 0
      %p79 = por %p77, %p78
      %p80 = scmp.ne.s32.totalorder %s68, %s69
      %p81 = scmp.eq.s32.totalorder %s24, 1
      %p82 = por %p80, %p81
      %p84 = scmp.ne.s32.totalorder %s69, %s83
      %p85 = scmp.eq.s32.totalorder %s24, 0
      %p86 = por %p84, %p85
      %s87 = ssub.s32 %s25, %s37
      %p88 = scmp.eq.s32.totalorder %s87, 0
      %s90 = sadd.s32 %s89, 1
      %s91 = scalar_select %p88, %s89, %s90
      %p94 = pneg %p88
      %p95 = scmp.eq.s32.totalorder %s18, 1
      %p96 = por %p94, %p95
      %p97 = scmp.ne.s32.totalorder %s89, %s92
      %p98 = scmp.eq.s32.totalorder %s18, 0
      %p99 = por %p97, %p98
      %p100 = scmp.ne.s32.totalorder %s89, %s92
      %p101 = scmp.eq.s32.totalorder %s23, 1
      %p102 = por %p100, %p101
      %p103 = scmp.ne.s32.totalorder %s92, %s93
      %p104 = scmp.eq.s32.totalorder %s23, 0
      %p105 = por %p103, %p104
      %p106 = scmp.ne.s32.totalorder %s92, %s93
      %p107 = scmp.eq.s32.totalorder %s24, 1
      %p108 = por %p106, %p107
      %p110 = scmp.ne.s32.totalorder %s93, %s109
      %p111 = scmp.eq.s32.totalorder %s24, 0
      %p112 = por %p110, %p111
      %s113 = ssub.s32 %s25, %s37
      %p114 = scmp.eq.s32.totalorder %s113, 0
      %s116 = sadd.s32 %s115, 1
      %s117 = scalar_select %p114, %s115, %s116
      %p120 = pneg %p114
      %p121 = scmp.eq.s32.totalorder %s18, 1
      %p122 = por %p120, %p121
      %p123 = scmp.ne.s32.totalorder %s115, %s118
      %p124 = scmp.eq.s32.totalorder %s18, 0
      %p125 = por %p123, %p124
      %p126 = scmp.ne.s32.totalorder %s115, %s118
      %p127 = scmp.eq.s32.totalorder %s23, 1
      %p128 = por %p126, %p127
      %p129 = scmp.ne.s32.totalorder %s118, %s119
      %p130 = scmp.eq.s32.totalorder %s23, 0
      %p131 = por %p129, %p130
      %p132 = scmp.ne.s32.totalorder %s118, %s119
      %p133 = scmp.eq.s32.totalorder %s24, 1
      %p134 = por %p132, %p133
      %p136 = scmp.ne.s32.totalorder %s119, %s135
      %p137 = scmp.eq.s32.totalorder %s24, 0
      %p138 = por %p136, %p137
      %s140 = sadd.s32 %s139, 1
      %p143 = scmp.eq.s32.totalorder %s18, 1
      %p144 = scmp.ne.s32.totalorder %s139, %s141
      %p145 = scmp.eq.s32.totalorder %s18, 0
      %p146 = por %p144, %p145
      %p147 = scmp.ne.s32.totalorder %s139, %s141
      %p148 = scmp.eq.s32.totalorder %s23, 1
      %p149 = por %p147, %p148
      %p150 = scmp.ne.s32.totalorder %s141, %s142
      %p151 = scmp.eq.s32.totalorder %s23, 0
      %p152 = por %p150, %p151
      %p153 = scmp.ne.s32.totalorder %s141, %s142
      %p154 = scmp.eq.s32.totalorder %s24, 1
      %p155 = por %p153, %p154
      %p157 = scmp.ne.s32.totalorder %s142, %s156
      %p158 = scmp.eq.s32.totalorder %s24, 0
      %p159 = por %p157, %p158
      %s160 = ssub.s32 %s25, %s37
      %s161 = ssub.s32 %s26, %s33
      %s162 = sor.u32 %s160, %s161
      %p163 = scmp.eq.s32.totalorder %s162, 0
      %s165 = sadd.s32 %s164, 1
      %s166 = scalar_select %p163, %s164, %s165
      %p169 = pneg %p163
      %p170 = scmp.eq.s32.totalorder %s18, 1
      %p171 = por %p169, %p170
      %p172 = scmp.ne.s32.totalorder %s164, %s167
      %p173 = scmp.eq.s32.totalorder %s18, 0
      %p174 = por %p172, %p173
      %p175 = scmp.ne.s32.totalorder %s164, %s167
      %p176 = scmp.eq.s32.totalorder %s23, 1
      %p177 = por %p175, %p176
      %p178 = scmp.ne.s32.totalorder %s167, %s168
      %p179 = scmp.eq.s32.totalorder %s23, 0
      %p180 = por %p178, %p179
      %p181 = scmp.ne.s32.totalorder %s167, %s168
      %p182 = scmp.eq.s32.totalorder %s24, 1
      %p183 = por %p181, %p182
      %p185 = scmp.ne.s32.totalorder %s168, %s184
      %p186 = scmp.eq.s32.totalorder %s24, 0
      %p187 = por %p185, %p186
      %p188 = scmp.le.s32.totalorder 1, %s18
      %p189 = scmp.lt.s32.totalorder %s18, 3
      %p190 = pnand %p188, %p189
      %p191 = pneg %p190
      // Predicated region
      $region9: #{tpu_custom_call.1} parent=5 // pred_check
        _
      $region10: #{tpu_custom_call.1} parent=5 // pred_check_branch
        %193 = sbr.rel (%p190) target = $region12
      $region11: #{tpu_custom_call.1} parent=5 // pred_region
        %s194 = ssub.s32 %s18, 1
        // Predicated region
        $region13: #{tpu_custom_call.1} parent=11 // pred_check
          %p195 = pneg %p79
        $region14: #{tpu_custom_call.1} parent=11 // pred_check_branch
          %197 = sbr.rel (%p195) target = $region16
        $region15: #{tpu_custom_call.1} parent=11 // pred_region
          %199 = vsyncadd [#allocation6], 0
          %s200 = sshll.u32 %s1, 4
          %s201 = int_to_ptr.hbm [resolvable:$true] %s200
          %s202 = sshll.u32 [#allocation5], 4
          %s203 = int_to_ptr.vmem [resolvable:$true] %s202
          %208 = dma.hbm_to_vmem [thread:$0]  %s201, 256, %s203, [#allocation6], 64, 64, 4
        $region16: #{tpu_custom_call.1} parent=11 // pred_fallthru
          _
        // Predicated region
        $region17: #{tpu_custom_call.1} parent=11 // pred_check
          %p209 = pneg %p152
        $region18: #{tpu_custom_call.1} parent=11 // pred_check_branch
          %211 = sbr.rel (%p209) target = $region20
        $region19: #{tpu_custom_call.1} parent=11 // pred_region
          %213 = vsyncadd [#allocation6], 0
          %s214 = sshll.u32 %s4, 4
          %s215 = int_to_ptr.hbm [resolvable:$true] %s214
          %s216 = sshll.u32 [#allocation8], 4
          %s217 = int_to_ptr.vmem [resolvable:$true] %s216
          %222 = dma.hbm_to_vmem [thread:$0]  %s215, 2048, %s217, [#allocation6], 128, 128, 8
        $region20: #{tpu_custom_call.1} parent=11 // pred_fallthru
          _
      $region12: #{tpu_custom_call.1} parent=5 // pred_fallthru
        _
      %p223 = scmp.lt.s32.totalorder %s18, 2
      // Predicated region
      $region21: #{tpu_custom_call.1} parent=5 // pred_check
        %p224 = pneg %p223
      $region22: #{tpu_custom_call.1} parent=5 // pred_check_branch
        %226 = sbr.rel (%p224) target = $region24
      $region23: #{tpu_custom_call.1} parent=5 // pred_region
        // Predicated region
        $region25: #{tpu_custom_call.1} parent=23 // pred_check
          %p227 = pneg %p52
        $region26: #{tpu_custom_call.1} parent=23 // pred_check_branch
          %229 = sbr.rel (%p227) target = $region28
        $region27: #{tpu_custom_call.1} parent=23 // pred_region
          %s230 = sand.u32 %s18, 1
          %s231 = scalar_lea.sflag [#allocation3], %s230
          %s232 = sand.u32 %s42, 1
          %s233 = smul.addr %s232, 4
          %s234 = scalar_lea.vmem [#allocation2], %s233
          %236 = vsyncadd %s231, 0
          %s237 = sadd.s32 %s26, %s25
          %s238 = smul.addr %s237, 4
          %s239 = scalar_lea.hbm %s0, %s238
          %s241 = sshll.u32 %s239, 4
          %s242 = int_to_ptr.hbm [resolvable:$true] %s241
          %s243 = sshll.u32 %s234, 4
          %s244 = int_to_ptr.vmem [resolvable:$true] %s243
          %246 = dma.hbm_to_vmem [thread:$0]  %s242, 64, %s244, %s231
        $region28: #{tpu_custom_call.1} parent=23 // pred_fallthru
          _
        // Predicated region
        $region29: #{tpu_custom_call.1} parent=23 // pred_check
          %p247 = pneg %p99
        $region30: #{tpu_custom_call.1} parent=23 // pred_check_branch
          %249 = sbr.rel (%p247) target = $region32
        $region31: #{tpu_custom_call.1} parent=23 // pred_region
          %s250 = sand.u32 %s18, 1
          %s251 = scalar_lea.sflag [#allocation3], %s250
          %s252 = sand.u32 %s89, 1
          %s253 = scalar_lea.vmem [#allocation7], %s252
          %255 = vsyncadd %s251, 0
          %s256 = scalar_lea.hbm %s2, %s25
          %s258 = sshll.u32 %s256, 4
          %s259 = int_to_ptr.hbm [resolvable:$true] %s258
          %s260 = sshll.u32 %s253, 4
          %s261 = int_to_ptr.vmem [resolvable:$true] %s260
          %263 = dma.hbm_to_vmem [thread:$0]  %s259, 16, %s261, %s251
        $region32: #{tpu_custom_call.1} parent=23 // pred_fallthru
          _
        // Predicated region
        $region33: #{tpu_custom_call.1} parent=23 // pred_check
          %p264 = pneg %p125
        $region34: #{tpu_custom_call.1} parent=23 // pred_check_branch
          %266 = sbr.rel (%p264) target = $region36
        $region35: #{tpu_custom_call.1} parent=23 // pred_region
          %p267 = scmp.lt.s32.totalorder %s25, 1
          %s268 = scalar_select %p267, %s25, 1
          %s269 = scalar_lea.vmem %s3, %s268
        $region36: #{tpu_custom_call.1} parent=23 // pred_fallthru
          _
      $region24: #{tpu_custom_call.1} parent=5 // pred_fallthru
        _
      %p270 = scmp.le.s32.totalorder 1, %s18
      %p271 = scmp.lt.s32.totalorder %s18, 3
      %p272 = pnand %p270, %p271
      %p273 = pneg %p272
      // Predicated region
      $region37: #{tpu_custom_call.1} parent=5 // pred_check
        _
      $region38: #{tpu_custom_call.1} parent=5 // pred_check_branch
        %275 = sbr.rel (%p272) target = $region40
      $region39: #{tpu_custom_call.1} parent=5 // pred_region
        %s276 = ssub.s32 %s18, 1
        %s277 = sand.u32 %s23, 1
        %s278 = scalar_lea.sflag [#allocation3], %s277
        %s279 = sand.u32 %s45, 1
        %s280 = smul.addr %s279, 4
        %s281 = scalar_lea.vmem [#allocation2], %s280
        // Predicated region
        $region41: #{tpu_custom_call.1} parent=39 // pred_check
          %p282 = pneg %p58
        $region42: #{tpu_custom_call.1} parent=39 // pred_check_branch
          %284 = sbr.rel (%p282) target = $region44
        $region43: #{tpu_custom_call.1} parent=39 // pred_region
          %286 = dma.done %s278, 64
        $region44: #{tpu_custom_call.1} parent=39 // pred_fallthru
          _
        // Predicated region
        $region45: #{tpu_custom_call.1} parent=39 // pred_check
          %p287 = pneg %p79
        $region46: #{tpu_custom_call.1} parent=39 // pred_check_branch
          %289 = sbr.rel (%p287) target = $region48
        $region47: #{tpu_custom_call.1} parent=39 // pred_region
          %291 = dma.done [#allocation6], 256
        $region48: #{tpu_custom_call.1} parent=39 // pred_fallthru
          _
        %s292 = sand.u32 %s23, 1
        %s293 = scalar_lea.sflag [#allocation3], %s292
        %s294 = sand.u32 %s92, 1
        %s295 = scalar_lea.vmem [#allocation7], %s294
        // Predicated region
        $region49: #{tpu_custom_call.1} parent=39 // pred_check
          %p296 = pneg %p105
        $region50: #{tpu_custom_call.1} parent=39 // pred_check_branch
          %298 = sbr.rel (%p296) target = $region52
        $region51: #{tpu_custom_call.1} parent=39 // pred_region
          %300 = dma.done %s293, 16
        $region52: #{tpu_custom_call.1} parent=39 // pred_fallthru
          _
        // Predicated region
        $region53: #{tpu_custom_call.1} parent=39 // pred_check
          %p301 = pneg %p152
        $region54: #{tpu_custom_call.1} parent=39 // pred_check_branch
          %303 = sbr.rel (%p301) target = $region56
        $region55: #{tpu_custom_call.1} parent=39 // pred_region
          %305 = dma.done [#allocation6], 2048
        $region56: #{tpu_custom_call.1} parent=39 // pred_fallthru
          _
        %s306 = sand.u32 %s23, 1
        %s307 = scalar_lea.sflag [#allocation3], %s306
        %s308 = sand.u32 %s45, 1
        %s309 = smul.addr %s308, 4
        %s310 = scalar_lea.vmem [#allocation2], %s309
        %p311 = pneg %p58
        %p312 = pneg %p55
        %p313 = pneg %p79
        %p314 = pneg %p76
        %s315 = sand.u32 %s23, 1
        %s316 = scalar_lea.sflag [#allocation3], %s315
        %s317 = sand.u32 %s92, 1
        %s318 = scalar_lea.vmem [#allocation7], %s317
        %p319 = pneg %p105
        %p320 = pneg %p102
        %p321 = scmp.lt.s32.totalorder %s27, 1
        %s322 = scalar_select %p321, %s27, 1
        %s323 = scalar_lea.vmem %s3, %s322
        %p324 = pneg %p131
        %p325 = pneg %p128
        %p326 = pneg %p152
        %p327 = pneg %p149
        %p328 = pneg %p180
        %p329 = pneg %p177
        %s330 = sand.u32 %s167, 1
        %s331 = scalar_lea.sflag [#allocation4], %s330
        %s332 = sand.u32 %s167, 1
        %s333 = smul.addr %s332, 8
        %s334 = scalar_lea.vmem [#allocation9], %s333
        %p335 = scmp.lt.s32.totalorder %s27, 1
        %s336 = scalar_select %p335, %s27, 1
        %s337 = scalar_lea.vmem %s3, %s336
        %v339 = vld [vmem:[%s281] sm:$0xf]
        %v340 = vld [vmem:[#allocation5] sm:$0xf]
        %v341 = vld [vmem:[#allocation5 + $0x4] sm:$0xf]
        %v342 = vld [vmem:[#allocation5 + $0x8] sm:$0xf]
        %v343 = vld [vmem:[#allocation5 + $0xc] sm:$0xf]
        %v348 = vunpack.c.l.b16 %v340
        %v349 = vunpack.c.l.b16 %v341
        %v350 = vunpack.c.l.b16 %v342
        %v351 = vunpack.c.l.b16 %v343
        %v352 = vpack.c.b16 %v349, %v348
        %v353 = vpack.c.b16 %v351, %v350
        %vm356 = vcmask 261120
        %v358 = vsel %vm356, %v339, 0
        %360 = vmatpush.bf16.msra.mxu0 0
        %361 = vmatpush.bf16.msra.mxu0 0
        %362 = vmatpush.bf16.msra.mxu0 0
        %363 = vmatpush.bf16.msra.mxu0 0
        %364 = vmatpush.bf16.msra.mxu0 0
        %365 = vmatpush.bf16.msra.mxu0 0
        %366 = vmatpush.bf16.msra.mxu0 %v353
        %367 = vmatpush.bf16.msra.mxu0 %v352
        %368 = vmatmul.bf16.gmra.mxu0 %v358
        %v369 = vpop.f32.mrf.mxu0
        %v370 = vadd.f32 0.0, %v369
        %v371 = vpop.f32.mrf.mxu0
        %372 = vdwg.mxu0
        %v373 = vld [vmem:[%s295] sm:$0x1]
        %v374 = vld [vmem:[%s337] sm:$0x1]
        %v376 = vperm.slane %v373, 0
        %v378 = vmul.f32 %v370, %v376
        %v379 = vld [vmem:[#allocation8] sm:$0xff]
        %v380 = vld [vmem:[#allocation8 + $0x8] sm:$0xff]
        %v381 = vld [vmem:[#allocation8 + $0x10] sm:$0xff]
        %v382 = vld [vmem:[#allocation8 + $0x18] sm:$0xff]
        %v383 = vld [vmem:[#allocation8 + $0x20] sm:$0xff]
        %v384 = vld [vmem:[#allocation8 + $0x28] sm:$0xff]
        %v385 = vld [vmem:[#allocation8 + $0x30] sm:$0xff]
        %v386 = vld [vmem:[#allocation8 + $0x38] sm:$0xff]
        %v387 = vld [vmem:[#allocation8 + $0x40] sm:$0xff]
        %v388 = vld [vmem:[#allocation8 + $0x48] sm:$0xff]
        %v389 = vld [vmem:[#allocation8 + $0x50] sm:$0xff]
        %v390 = vld [vmem:[#allocation8 + $0x58] sm:$0xff]
        %v391 = vld [vmem:[#allocation8 + $0x60] sm:$0xff]
        %v392 = vld [vmem:[#allocation8 + $0x68] sm:$0xff]
        %v393 = vld [vmem:[#allocation8 + $0x70] sm:$0xff]
        %v394 = vld [vmem:[#allocation8 + $0x78] sm:$0xff]
        %395 = vmatpush.msra.mxu0 %v394
        %396 = vmatpush.msra.mxu0 %v393
        %397 = vmatpush.msra.mxu0 %v392
        %398 = vmatpush.msra.mxu0 %v391
        %399 = vmatpush.msra.mxu0 %v390
        %400 = vmatpush.msra.mxu0 %v389
        %401 = vmatpush.msra.mxu0 %v388
        %402 = vmatpush.msra.mxu0 %v387
        %403 = vmatpush.msra.mxu0 %v386
        %404 = vmatpush.msra.mxu0 %v385
        %405 = vmatpush.msra.mxu0 %v384
        %406 = vmatpush.msra.mxu0 %v383
        %407 = vmatpush.msra.mxu0 %v382
        %408 = vmatpush.msra.mxu0 %v381
        %409 = vmatpush.msra.mxu0 %v380
        %410 = vmatpush.msra.mxu0 %v379
        %411 = vmatmul.f32.gmra.mxu0 %v378
        %v412 = vpop.f32.mrf.mxu0
        %v413 = vadd.f32 0.0, %v412
        %414 = vdwg.mxu0
        %vm415 = vcmp.gt.f32.partialorder %v374, 0.5
        %v416 = vsel %vm415, 1, 0
        %v417 = vperm.slane %v416, 0
        %vm418 = vcmp.eq.s32.totalorder %v417, 1
        %v419 = vsel %vm418, %v413, -3.4028235e+38
        %420 = vst [vmem:[%s334] sm:$0xff] %v419
        %s421 = sand.u32 %s167, 1
        %s422 = scalar_lea.sflag [#allocation4], %s421
        %s423 = sand.u32 %s167, 1
        %s424 = smul.addr %s423, 8
        %s425 = scalar_lea.vmem [#allocation9], %s424
        // Predicated region
        $region57: #{tpu_custom_call.1} parent=39 // pred_check
          %p426 = pneg %p177
        $region58: #{tpu_custom_call.1} parent=39 // pred_check_branch
          %428 = sbr.rel (%p426) target = $region60
        $region59: #{tpu_custom_call.1} parent=39 // pred_region
          %430 = vsyncadd %s422, 0
          %s431 = sadd.s32 %s28, %s27
          %s432 = smul.addr %s431, 8
          %s433 = scalar_lea.hbm %s5, %s432
          %s435 = sshll.u32 %s425, 4
          %s436 = int_to_ptr.vmem [resolvable:$true] %s435
          %s437 = sshll.u32 %s433, 4
          %s438 = int_to_ptr.hbm [resolvable:$true] %s437
          %440 = dma.vmem_to_hbm [thread:$0]  %s436, 128, %s438, %s422
        $region60: #{tpu_custom_call.1} parent=39 // pred_fallthru
          _
      $region40: #{tpu_custom_call.1} parent=5 // pred_fallthru
        _
      %p441 = scmp.le.s32.totalorder 2, %s18
      // Predicated region
      $region61: #{tpu_custom_call.1} parent=5 // pred_check
        %p442 = pneg %p441
      $region62: #{tpu_custom_call.1} parent=5 // pred_check_branch
        %444 = sbr.rel (%p442) target = $region64
      $region63: #{tpu_custom_call.1} parent=5 // pred_region
        %s445 = ssub.s32 %s18, 2
        // Predicated region
        $region65: #{tpu_custom_call.1} parent=63 // pred_check
          %p446 = pneg %p183
        $region66: #{tpu_custom_call.1} parent=63 // pred_check_branch
          %448 = sbr.rel (%p446) target = $region68
        $region67: #{tpu_custom_call.1} parent=63 // pred_region
          %s449 = sand.u32 %s168, 1
          %s450 = scalar_lea.sflag [#allocation4], %s449
          %s451 = sand.u32 %s168, 1
          %s452 = smul.addr %s451, 8
          %s453 = scalar_lea.vmem [#allocation9], %s452
          %455 = dma.done %s450, 128
        $region68: #{tpu_custom_call.1} parent=63 // pred_fallthru
          _
      $region64: #{tpu_custom_call.1} parent=5 // pred_fallthru
        _
    $region6: #{tpu_custom_call.1} parent=1 // loop_footer
      %s22 = sadd.s32 1, %s18
    $region7: #{tpu_custom_call.1} parent=1 // loop_footer_branch
      %17 = sbr.rel target = $region3
    $region8: #{tpu_custom_call.1} parent=1 // loop_exit
      _
    %456 = vsyncpa [#allocation3], 1
    %s457 = scalar_lea.sflag [#allocation3], 1
    %458 = vsyncpa %s457, 1
    %459 = vsyncpa [#allocation6], 1
    %460 = vsyncpa [#allocation4], 1
    %s461 = scalar_lea.sflag [#allocation4], 1
    %462 = vsyncpa %s461, 1

</llo_original>
